<compile_context>
chip_gen: v7x
topology: tpu7x:2x2x1
jax: 0.10.0
libtpu: 0.0.40
codegen_flags: <defaults>
</compile_context>

<pallas_src>
import functools
import math

import jax
import jax.numpy as jnp
from jax.experimental import pallas as pl
from jax.experimental.pallas import tpu as pltpu

_NUM_CORES = 2                      # leading "parallel" grid axis (v7x: 2 TCs/chip)
_NEG_LOG_CLAMP = -math.log(1e-4)    # -log(clamp(one_hot=0, min=1e-4)) = 9.2103...


def _round_up(x, m):
    return (x + m - 1) // m * m


def _mixed_loss_kernel(labels_ref, pred_ref, ce_ref, rce_ref, mse_ref,
                       acc_ce, acc_rce, acc_mse, *,
                       n_valid: int, tn: int, steps_per_core: int):
    core = pl.program_id(0)
    step = pl.program_id(1)

    @pl.when(step == 0)
    def _():
        acc_ce[...] = jnp.zeros_like(acc_ce)
        acc_rce[...] = jnp.zeros_like(acc_rce)
        acc_mse[...] = jnp.zeros_like(acc_mse)

    pred = pred_ref[...].astype(jnp.float32)               # (TN, C)
    rows, num_classes = pred.shape
    labels = labels_ref[...]                               # (TN, 1) int32

    # Mask rows that are batch padding (global row >= N).
    row0 = (core * steps_per_core + step) * tn
    row = jax.lax.broadcasted_iota(jnp.int32, (rows, 1), 0) + row0
    valid = (row < n_valid).astype(jnp.float32)            # (TN, 1)

    # --- softmax statistics (log-softmax never materialized) ---
    m = jnp.max(pred, axis=1, keepdims=True)               # (TN, 1)
    shifted = pred - m                                     # (TN, C)
    e = jnp.exp(shifted)                                   # (TN, C)  EUP
    sum_e = jnp.sum(e, axis=1, keepdims=True)              # (TN, 1)  XLU
    lse = jnp.log(sum_e)                                   # (TN, 1)

    # one-hot(labels) via lane-iota compare
    col = jax.lax.broadcasted_iota(jnp.int32, (rows, num_classes), 1)
    is_label = col == labels                               # (TN, C)
    one_hot = is_label.astype(jnp.float32)

    # cross entropy per row: lse - shifted[label]
    shifted_lab = jnp.sum(jnp.where(is_label, shifted, 0.0), axis=1, keepdims=True)
    ce_i = (lse - shifted_lab) * valid                     # (TN, 1)

    # softmax probabilities; reciprocal goes to the EUP slot
    p = e * pl.reciprocal(sum_e, approx=True)              # (TN, C)

    # mse: sum_c (p - one_hot)^2 per row (uses unclamped p, as in PyTorch)
    d = p - one_hot
    mse_i = jnp.sum(d * d, axis=1, keepdims=True) * valid  # (TN, 1)

    # rce: -sum_c clamp(p,1e-7,1) * log(clamp(one_hot,1e-4,1))
    #   log(clamp(one_hot)) == 0 on the label class, log(1e-4) elsewhere.
    pc = jnp.maximum(p, 1e-7)
    pc_off = jnp.sum(jnp.where(is_label, 0.0, pc), axis=1, keepdims=True)
    rce_i = _NEG_LOG_CLAMP * pc_off * valid                # (TN, 1)

    acc_ce[...] += ce_i
    acc_rce[...] += rce_i
    acc_mse[...] += mse_i

    @pl.when(step == steps_per_core - 1)
    def _():
        ce_ref[...] = jnp.broadcast_to(jnp.sum(acc_ce[...], keepdims=True), ce_ref.shape)
        rce_ref[...] = jnp.broadcast_to(jnp.sum(acc_rce[...], keepdims=True), rce_ref.shape)
        mse_ref[...] = jnp.broadcast_to(jnp.sum(acc_mse[...], keepdims=True), mse_ref.shape)


def _choose_row_tile(n, c, itemsize):
    # Biggest row tile whose pred buffer is <= ~8 MiB (Pallas double-buffers it
    # -> ~16 MiB); safe on v7x's 64 MiB VMEM and past the HBM-roofline knee
    # (>=512 rows) on v5e/v6e for realistic C.  Multiple of 16 so both f32 (8)
    # and bf16 (16) sublane tilings are legal.
    target_bytes = 8 * 1024 * 1024
    tn = (target_bytes // max(1, c * itemsize)) // 16 * 16
    tn = min(tn, _round_up(n, 16))
    return max(16, int(tn))


def mixed_loss_components(pred, labels, *, row_tile=None):
    """Returns (ce, rce, mse) means as f32 scalars via one Pallas pass over pred."""
    n, c = pred.shape
    itemsize = jnp.dtype(pred.dtype).itemsize
    tn = row_tile if row_tile is not None else _choose_row_tile(n, c, itemsize)

    steps_total = pl.cdiv(n, tn)
    steps_per_core = pl.cdiv(steps_total, _NUM_CORES)
    n_pad = _NUM_CORES * steps_per_core * tn

    pred_p = jnp.pad(pred, ((0, n_pad - n), (0, 0)))
    labels_p = jnp.pad(labels.astype(jnp.int32), (0, n_pad - n)).reshape(n_pad, 1)

    out_shape = jax.ShapeDtypeStruct((_NUM_CORES * 8, 128), jnp.float32)
    out_map = lambda core, step: (core, 0)
    in_map = lambda core, step: (core * steps_per_core + step, 0)

    kernel = functools.partial(_mixed_loss_kernel, n_valid=n, tn=tn,
                               steps_per_core=steps_per_core)

    # VMEM budget: double-buffered (pred + labels) tiles + scratch + outputs.
    needed = (2 * (tn * c * itemsize + tn * 4) + 3 * tn * 4
              + 3 * 2 * _NUM_CORES * 8 * 128 * 4 + (1 << 20))
    vmem_limit = int(min(64 << 20, max(32 << 20, needed * 5 // 4)))

    cost = pl.CostEstimate(
        flops=10 * n * c,
        transcendentals=n * c + 2 * n,       # exp per element, log+recip per row
        bytes_accessed=n * c * itemsize + n * 4 + 3 * _NUM_CORES * 8 * 128 * 4)

    ce_p, rce_p, mse_p = pl.pallas_call(
        kernel,
        out_shape=(out_shape, out_shape, out_shape),
        grid_spec=pltpu.PrefetchScalarGridSpec(
            num_scalar_prefetch=0,
            grid=(_NUM_CORES, steps_per_core),
            in_specs=[
                pl.BlockSpec((tn, 1), in_map),   # labels (N_pad, 1) int32
                pl.BlockSpec((tn, c), in_map),   # pred   (N_pad, C)
            ],
            out_specs=[
                pl.BlockSpec((8, 128), out_map),
                pl.BlockSpec((8, 128), out_map),
                pl.BlockSpec((8, 128), out_map),
            ],
            scratch_shapes=[pltpu.VMEM((tn, 1), jnp.float32)] * 3,
        ),
        compiler_params=pltpu.CompilerParams(
            dimension_semantics=("parallel", "arbitrary"),
            vmem_limit_bytes=vmem_limit),
        cost_estimate=cost,
    )(labels_p, pred_p)

    # Each core's (8,128) block is a broadcast of its partial sum; combine.
    ce_sum = jnp.sum(ce_p.reshape(_NUM_CORES, 8, 128)[:, 0, 0])
    rce_sum = jnp.sum(rce_p.reshape(_NUM_CORES, 8, 128)[:, 0, 0])
    mse_sum = jnp.sum(mse_p.reshape(_NUM_CORES, 8, 128)[:, 0, 0])

    n_f = jnp.float32(n)
    return ce_sum / n_f, rce_sum / n_f, mse_sum / (n_f * c)


_ACTIVATIONS = {
    "Sigmoid": jax.nn.sigmoid,
    "ReLU": jax.nn.relu,
    "Tanh": jnp.tanh,
    "Softplus": jax.nn.softplus,
    "ELU": jax.nn.elu,
    "GELU": jax.nn.gelu,
    "Identity": lambda x: x,
}


class MixedLossMAE:
    """JAX/Pallas port of the PyTorch Mixed_loss_mae module (forward only)."""

    def __init__(self, alpha_ce, alpha_rce, alpha_mae, alpha_mse, activation_type):
        self.alpha_ce = jnp.float32(alpha_ce)
        self.alpha_rce = jnp.float32(alpha_rce)
        self.alpha_mae = jnp.float32(alpha_mae)
        self.alpha_mse = jnp.float32(alpha_mse)
        self.activation = _ACTIVATIONS[activation_type]

    def __call__(self, pred, labels):
        ce, rce, mse = mixed_loss_components(pred, labels)
        ce_w = self.activation(self.alpha_ce)
        rce_w = self.activation(self.alpha_rce)
        mae_w = self.activation(self.alpha_mae)   # computed but unused (matches PyTorch)
        mse_w = self.activation(self.alpha_mse)
        del mae_w
        return ce_w * ce + rce_w * rce + mse_w * mse


def _reference(pred, labels, alpha_ce, alpha_rce, alpha_mae, alpha_mse, act):
    pred = pred.astype(jnp.float32)
    n, c = pred.shape
    logp = jax.nn.log_softmax(pred, axis=1)
    ce = -jnp.mean(jnp.take_along_axis(logp, labels[:, None].astype(jnp.int32), axis=1))
    p = jax.nn.softmax(pred, axis=1)
    oh = jax.nn.one_hot(labels, c, dtype=jnp.float32)
    mse = jnp.mean((p - oh) ** 2)
    pc = jnp.clip(p, 1e-7, 1.0)
    ohc = jnp.clip(oh, 1e-4, 1.0)
    rce = jnp.mean(-jnp.sum(pc * jnp.log(ohc), axis=1))
    return act(alpha_ce) * ce + act(alpha_rce) * rce + act(alpha_mse) * mse


if __name__ == "__main__":
    batch, num_classes = 8, 32
    alpha_ce, alpha_rce, alpha_mae, alpha_mse = 0.6, 0.3, 0.2, 0.5

    key = jax.random.PRNGKey(0)
    kp, kl = jax.random.split(key)
    pred = jax.random.normal(kp, (batch, num_classes), dtype=jnp.float32)
    labels = jax.random.randint(kl, (batch,), 0, num_classes, dtype=jnp.int32)

    loss_fn = MixedLossMAE(alpha_ce, alpha_rce, alpha_mae, alpha_mse, "Sigmoid")
    out = loss_fn(pred, labels)
    out = jax.block_until_ready(out)

    ref = _reference(pred, labels, jnp.float32(alpha_ce), jnp.float32(alpha_rce),
                     jnp.float32(alpha_mae), jnp.float32(alpha_mse), jax.nn.sigmoid)
    # approx reciprocal (EUP vrcp) carries ~2^-12 relative error -> 2e-3 tolerance
    assert jnp.allclose(out, ref, rtol=2e-3, atol=2e-3), (out, ref)
    print("KERNEL_OK")
</pallas_src>

<mosaic_0001>
module attributes {stable_mosaic.version = 11 : i64} {
  func.func @_mixed_loss_kernel(%arg0: i32, %arg1: i32, %arg2: memref<16x1xi32, #tpu.memory_space<vmem>>, %arg3: memref<16x32xf32, #tpu.memory_space<vmem>>, %arg4: memref<8x128xf32, #tpu.memory_space<vmem>>, %arg5: memref<8x128xf32, #tpu.memory_space<vmem>>, %arg6: memref<8x128xf32, #tpu.memory_space<vmem>>, %arg7: memref<16x1xf32, #tpu.memory_space<vmem>>, %arg8: memref<16x1xf32, #tpu.memory_space<vmem>>, %arg9: memref<16x1xf32, #tpu.memory_space<vmem>>) attributes {dimension_semantics = [#tpu.dimension_semantics<parallel>, #tpu.dimension_semantics<arbitrary>], iteration_bounds = array<i64: 2, 1>, scalar_prefetch = 0 : i64, scratch_operands = 3 : i64, tpu.core_type = #tpu.core_type<tc>, window_params = [{transform_indices = @transform_0, window_bounds = array<i64: 16, 1>}, {transform_indices = @transform_1, window_bounds = array<i64: 16, 32>}, {transform_indices = @transform_2, window_bounds = array<i64: 8, 128>}, {transform_indices = @transform_3, window_bounds = array<i64: 8, 128>}, {transform_indices = @transform_4, window_bounds = array<i64: 8, 128>}]} {
    %c0_i32 = arith.constant 0 : i32
    %0 = arith.cmpi eq, %arg1, %c0_i32 : i32
    %1 = arith.extui %0 : i1 to i32
    %c0_i32_0 = arith.constant 0 : i32
    %2 = arith.cmpi ne, %1, %c0_i32_0 : i32
    scf.if %2 {
      %cst_26 = arith.constant 0.000000e+00 : f32
      %63 = vector.broadcast %cst_26 : f32 to vector<16x1xf32>
      %c0_27 = arith.constant 0 : index
      %c0_28 = arith.constant 0 : index
      %64 = vector.load %arg7[%c0_27, %c0_28] : memref<16x1xf32, #tpu.memory_space<vmem>>, vector<16x1xf32>
      tpu.vector_store %arg7[%c0_27, %c0_28], %63 {strides = array<i32>} : memref<16x1xf32, #tpu.memory_space<vmem>>, vector<16x1xf32>,
      %cst_29 = arith.constant 0.000000e+00 : f32
      %65 = vector.broadcast %cst_29 : f32 to vector<16x1xf32>
      %c0_30 = arith.constant 0 : index
      %c0_31 = arith.constant 0 : index
      %66 = vector.load %arg8[%c0_30, %c0_31] : memref<16x1xf32, #tpu.memory_space<vmem>>, vector<16x1xf32>
      tpu.vector_store %arg8[%c0_30, %c0_31], %65 {strides = array<i32>} : memref<16x1xf32, #tpu.memory_space<vmem>>, vector<16x1xf32>,
      %cst_32 = arith.constant 0.000000e+00 : f32
      %67 = vector.broadcast %cst_32 : f32 to vector<16x1xf32>
      %c0_33 = arith.constant 0 : index
      %c0_34 = arith.constant 0 : index
      %68 = vector.load %arg9[%c0_33, %c0_34] : memref<16x1xf32, #tpu.memory_space<vmem>>, vector<16x1xf32>
      tpu.vector_store %arg9[%c0_33, %c0_34], %67 {strides = array<i32>} : memref<16x1xf32, #tpu.memory_space<vmem>>, vector<16x1xf32>,
    } else {
    }
    %c0 = arith.constant 0 : index
    %c0_1 = arith.constant 0 : index
    %3 = vector.load %arg3[%c0, %c0_1] : memref<16x32xf32, #tpu.memory_space<vmem>>, vector<16x32xf32>
    %c0_2 = arith.constant 0 : index
    %c0_3 = arith.constant 0 : index
    %4 = vector.load %arg2[%c0_2, %c0_3] : memref<16x1xi32, #tpu.memory_space<vmem>>, vector<16x1xi32>
    %c1_i32 = arith.constant 1 : i32
    %5 = arith.muli %arg0, %c1_i32 : i32
    %6 = arith.addi %5, %arg1 : i32
    %c16_i32 = arith.constant 16 : i32
    %7 = arith.muli %6, %c16_i32 : i32
    %8 = tpu.iota {dimensions = array<i32: 0>} : vector<16x1xi32>
    %9 = vector.broadcast %7 : i32 to vector<16x1xi32>
    %10 = arith.addi %8, %9 : vector<16x1xi32>
    %c8_i32 = arith.constant 8 : i32
    %11 = vector.broadcast %c8_i32 : i32 to vector<16x1xi32>
    %12 = arith.cmpi slt, %10, %11 : vector<16x1xi32>
    %13 = arith.extui %12 : vector<16x1xi1> to vector<16x1xi32>
    %14 = arith.sitofp %13 : vector<16x1xi32> to vector<16x1xf32>
    %cst = arith.constant dense<0xFF800000> : vector<16xf32>
    %15 = vector.multi_reduction <maximumf>, %3, %cst [1] : vector<16x32xf32> to vector<16xf32>
    %16 = vector.shape_cast %15 : vector<16xf32> to vector<16x1xf32>
    %17 = vector.broadcast %16 : vector<16x1xf32> to vector<16x32xf32>
    %18 = arith.subf %3, %17 : vector<16x32xf32>
    %19 = math.exp %18 : vector<16x32xf32>
    %cst_4 = arith.constant dense<0.000000e+00> : vector<16xf32>
    %20 = vector.multi_reduction <add>, %19, %cst_4 [1] : vector<16x32xf32> to vector<16xf32>
    %21 = vector.shape_cast %20 : vector<16xf32> to vector<16x1xf32>
    %22 = math.log %21 : vector<16x1xf32>
    %23 = tpu.iota {dimensions = array<i32: 1>} : vector<16x32xi32>
    %24 = vector.broadcast %4 : vector<16x1xi32> to vector<16x32xi32>
    %25 = arith.cmpi eq, %23, %24 : vector<16x32xi32>
    %26 = arith.extui %25 : vector<16x32xi1> to vector<16x32xi32>
    %27 = arith.sitofp %26 : vector<16x32xi32> to vector<16x32xf32>
    %cst_5 = arith.constant 0.000000e+00 : f32
    %28 = vector.broadcast %cst_5 : f32 to vector<16x32xf32>
    %29 = arith.select %25, %18, %28 : vector<16x32xi1>, vector<16x32xf32>
    %cst_6 = arith.constant dense<0.000000e+00> : vector<16xf32>
    %30 = vector.multi_reduction <add>, %29, %cst_6 [1] : vector<16x32xf32> to vector<16xf32>
    %31 = vector.shape_cast %30 : vector<16xf32> to vector<16x1xf32>
    %32 = arith.subf %22, %31 : vector<16x1xf32>
    %33 = arith.mulf %32, %14 : vector<16x1xf32>
    %34 = tpu.reciprocal %21 {approx = true} : vector<16x1xf32> -> vector<16x1xf32>
    %35 = vector.broadcast %34 : vector<16x1xf32> to vector<16x32xf32>
    %36 = arith.mulf %19, %35 : vector<16x32xf32>
    %37 = arith.subf %36, %27 : vector<16x32xf32>
    %38 = arith.mulf %37, %37 : vector<16x32xf32>
    %cst_7 = arith.constant dense<0.000000e+00> : vector<16xf32>
    %39 = vector.multi_reduction <add>, %38, %cst_7 [1] : vector<16x32xf32> to vector<16xf32>
    %40 = vector.shape_cast %39 : vector<16xf32> to vector<16x1xf32>
    %41 = arith.mulf %40, %14 : vector<16x1xf32>
    %cst_8 = arith.constant 1.000000e-07 : f32
    %42 = vector.broadcast %cst_8 : f32 to vector<16x32xf32>
    %43 = arith.maximumf %36, %42 : vector<16x32xf32>
    %cst_9 = arith.constant 0.000000e+00 : f32
    %44 = vector.broadcast %cst_9 : f32 to vector<16x32xf32>
    %45 = arith.select %25, %44, %43 : vector<16x32xi1>, vector<16x32xf32>
    %cst_10 = arith.constant dense<0.000000e+00> : vector<16xf32>
    %46 = vector.multi_reduction <add>, %45, %cst_10 [1] : vector<16x32xf32> to vector<16xf32>
    %47 = vector.shape_cast %46 : vector<16xf32> to vector<16x1xf32>
    %cst_11 = arith.constant 9.21034049 : f32
    %48 = vector.broadcast %cst_11 : f32 to vector<16x1xf32>
    %49 = arith.mulf %48, %47 : vector<16x1xf32>
    %50 = arith.mulf %49, %14 : vector<16x1xf32>
    %c0_12 = arith.constant 0 : index
    %c0_13 = arith.constant 0 : index
    %51 = vector.load %arg7[%c0_12, %c0_13] : memref<16x1xf32, #tpu.memory_space<vmem>>, vector<16x1xf32>
    %52 = arith.addf %51, %33 : vector<16x1xf32>
    %c0_14 = arith.constant 0 : index
    %c0_15 = arith.constant 0 : index
    %53 = vector.load %arg7[%c0_14, %c0_15] : memref<16x1xf32, #tpu.memory_space<vmem>>, vector<16x1xf32>
    tpu.vector_store %arg7[%c0_14, %c0_15], %52 {strides = array<i32>} : memref<16x1xf32, #tpu.memory_space<vmem>>, vector<16x1xf32>,
    %c0_16 = arith.constant 0 : index
    %c0_17 = arith.constant 0 : index
    %54 = vector.load %arg8[%c0_16, %c0_17] : memref<16x1xf32, #tpu.memory_space<vmem>>, vector<16x1xf32>
    %55 = arith.addf %54, %50 : vector<16x1xf32>
    %c0_18 = arith.constant 0 : index
    %c0_19 = arith.constant 0 : index
    %56 = vector.load %arg8[%c0_18, %c0_19] : memref<16x1xf32, #tpu.memory_space<vmem>>, vector<16x1xf32>
    tpu.vector_store %arg8[%c0_18, %c0_19], %55 {strides = array<i32>} : memref<16x1xf32, #tpu.memory_space<vmem>>, vector<16x1xf32>,
    %c0_20 = arith.constant 0 : index
    %c0_21 = arith.constant 0 : index
    %57 = vector.load %arg9[%c0_20, %c0_21] : memref<16x1xf32, #tpu.memory_space<vmem>>, vector<16x1xf32>
    %58 = arith.addf %57, %41 : vector<16x1xf32>
    %c0_22 = arith.constant 0 : index
    %c0_23 = arith.constant 0 : index
    %59 = vector.load %arg9[%c0_22, %c0_23] : memref<16x1xf32, #tpu.memory_space<vmem>>, vector<16x1xf32>
    tpu.vector_store %arg9[%c0_22, %c0_23], %58 {strides = array<i32>} : memref<16x1xf32, #tpu.memory_space<vmem>>, vector<16x1xf32>,
    %c0_i32_24 = arith.constant 0 : i32
    %60 = arith.cmpi eq, %arg1, %c0_i32_24 : i32
    %61 = arith.extui %60 : i1 to i32
    %c0_i32_25 = arith.constant 0 : i32
    %62 = arith.cmpi ne, %61, %c0_i32_25 : i32
    scf.if %62 {
      %c0_26 = arith.constant 0 : index
      %c0_27 = arith.constant 0 : index
      %63 = vector.load %arg7[%c0_26, %c0_27] : memref<16x1xf32, #tpu.memory_space<vmem>>, vector<16x1xf32>
      %64 = vector.shape_cast %63 : vector<16x1xf32> to vector<1x16x1xf32>
      %cst_28 = arith.constant dense<0.000000e+00> : vector<1xf32>
      %65 = vector.multi_reduction <add>, %64, %cst_28 [1, 2] : vector<1x16x1xf32> to vector<1xf32>
      %66 = vector.shape_cast %65 : vector<1xf32> to vector<1x1x1xf32>
      %67 = vector.extract %66[0, 0, 0] : f32 from vector<1x1x1xf32>
      %68 = vector.broadcast %67 : f32 to vector<1x1xf32>
      %69 = vector.shape_cast %68 : vector<1x1xf32> to vector<1x1xf32>
      %70 = vector.broadcast %69 : vector<1x1xf32> to vector<8x128xf32>
      %c0_29 = arith.constant 0 : index
      %c0_30 = arith.constant 0 : index
      %71 = vector.load %arg4[%c0_29, %c0_30] : memref<8x128xf32, #tpu.memory_space<vmem>>, vector<8x128xf32>
      tpu.vector_store %arg4[%c0_29, %c0_30], %70 {strides = array<i32>} : memref<8x128xf32, #tpu.memory_space<vmem>>, vector<8x128xf32>,
      %c0_31 = arith.constant 0 : index
      %c0_32 = arith.constant 0 : index
      %72 = vector.load %arg8[%c0_31, %c0_32] : memref<16x1xf32, #tpu.memory_space<vmem>>, vector<16x1xf32>
      %73 = vector.shape_cast %72 : vector<16x1xf32> to vector<1x16x1xf32>
      %cst_33 = arith.constant dense<0.000000e+00> : vector<1xf32>
      %74 = vector.multi_reduction <add>, %73, %cst_33 [1, 2] : vector<1x16x1xf32> to vector<1xf32>
      %75 = vector.shape_cast %74 : vector<1xf32> to vector<1x1x1xf32>
      %76 = vector.extract %75[0, 0, 0] : f32 from vector<1x1x1xf32>
      %77 = vector.broadcast %76 : f32 to vector<1x1xf32>
      %78 = vector.shape_cast %77 : vector<1x1xf32> to vector<1x1xf32>
      %79 = vector.broadcast %78 : vector<1x1xf32> to vector<8x128xf32>
      %c0_34 = arith.constant 0 : index
      %c0_35 = arith.constant 0 : index
      %80 = vector.load %arg5[%c0_34, %c0_35] : memref<8x128xf32, #tpu.memory_space<vmem>>, vector<8x128xf32>
      tpu.vector_store %arg5[%c0_34, %c0_35], %79 {strides = array<i32>} : memref<8x128xf32, #tpu.memory_space<vmem>>, vector<8x128xf32>,
      %c0_36 = arith.constant 0 : index
      %c0_37 = arith.constant 0 : index
      %81 = vector.load %arg9[%c0_36, %c0_37] : memref<16x1xf32, #tpu.memory_space<vmem>>, vector<16x1xf32>
      %82 = vector.shape_cast %81 : vector<16x1xf32> to vector<1x16x1xf32>
      %cst_38 = arith.constant dense<0.000000e+00> : vector<1xf32>
      %83 = vector.multi_reduction <add>, %82, %cst_38 [1, 2] : vector<1x16x1xf32> to vector<1xf32>
      %84 = vector.shape_cast %83 : vector<1xf32> to vector<1x1x1xf32>
      %85 = vector.extract %84[0, 0, 0] : f32 from vector<1x1x1xf32>
      %86 = vector.broadcast %85 : f32 to vector<1x1xf32>
      %87 = vector.shape_cast %86 : vector<1x1xf32> to vector<1x1xf32>
      %88 = vector.broadcast %87 : vector<1x1xf32> to vector<8x128xf32>
      %c0_39 = arith.constant 0 : index
      %c0_40 = arith.constant 0 : index
      %89 = vector.load %arg6[%c0_39, %c0_40] : memref<8x128xf32, #tpu.memory_space<vmem>>, vector<8x128xf32>
      tpu.vector_store %arg6[%c0_39, %c0_40], %88 {strides = array<i32>} : memref<8x128xf32, #tpu.memory_space<vmem>>, vector<8x128xf32>,
    } else {
    }
    return
  }
  func.func @transform_0(%arg0: i32, %arg1: i32) -> (i32, i32) {
    %c1_i32 = arith.constant 1 : i32
    %0 = arith.muli %arg0, %c1_i32 : i32
    %1 = arith.addi %0, %arg1 : i32
    %c0_i32 = arith.constant 0 : i32
    %c0_i32_0 = arith.constant 0 : i32
    return %1, %c0_i32 : i32, i32
  }
  func.func @transform_1(%arg0: i32, %arg1: i32) -> (i32, i32) {
    %c1_i32 = arith.constant 1 : i32
    %0 = arith.muli %arg0, %c1_i32 : i32
    %1 = arith.addi %0, %arg1 : i32
    %c0_i32 = arith.constant 0 : i32
    %c0_i32_0 = arith.constant 0 : i32
    return %1, %c0_i32 : i32, i32
  }
  func.func @transform_2(%arg0: i32, %arg1: i32) -> (i32, i32) {
    %c0_i32 = arith.constant 0 : i32
    %c0_i32_0 = arith.constant 0 : i32
    return %arg0, %c0_i32 : i32, i32
  }
  func.func @transform_3(%arg0: i32, %arg1: i32) -> (i32, i32) {
    %c0_i32 = arith.constant 0 : i32
    %c0_i32_0 = arith.constant 0 : i32
    return %arg0, %c0_i32 : i32, i32
  }
  func.func @transform_4(%arg0: i32, %arg1: i32) -> (i32, i32) {
    %c0_i32 = arith.constant 0 : i32
    %c0_i32_0 = arith.constant 0 : i32
    return %arg0, %c0_i32 : i32, i32
  }
}

</mosaic_0001>

<llo_original>
// kernel: tpu_custom_call.1
$region0: #{tpu_custom_call.1}
  #allocation0 [shape = 'u32[]', space=smem, size = 0x4, offset = 0x4, fixed_abs, tag = 'smem constant byte address 0x4 - core index']
  #allocation1 [shape = 'u32[144,128]{1,0:T(1,128)}', space=vmem, size = 0x12000, scoped, tag = 'internal scratch']
  #allocation2 [shape = 'f32[16,1]{1,0:T(8,128)}', space=vmem, size = 0x2000, scoped, tag = 'scratch operand']
  #allocation3 [shape = 'f32[16,1]{1,0:T(8,128)}', space=vmem, size = 0x2000, scoped, tag = 'scratch operand']
  #allocation4 [shape = 'f32[16,1]{1,0:T(8,128)}', space=vmem, size = 0x2000, scoped, tag = 'scratch operand']
  %s0 = inlined_call_operand.vmem [shape: s32[32,1], index: 0, kind: input, shape index: {}]
  %s1 = inlined_call_operand.vmem [shape: f32[32,32], index: 1, kind: input, shape index: {}]
  %s2 = inlined_call_operand.hbm [shape: f32[16,128], index: 2, kind: output, shape index: {0}]
  %s3 = inlined_call_operand.hbm [shape: f32[16,128], index: 3, kind: output, shape index: {1}]
  %s4 = inlined_call_operand.hbm [shape: f32[16,128], index: 4, kind: output, shape index: {2}]
  %5 = xla_tuple %s2, %s3, %s4
  %s6 = sld [smem:[#allocation0]]
  $region65: #{tpu_custom_call.1} parent=0
    _
  %s8 = ssub.s32 1, %s6
  %s9 = scalar_select 0, %s8, %s6
  $region1: #{tpu_custom_call.1} parent=0
    #allocation5 [shape = 'u8[8192]{0}', space=vmem, size = 0x2000, scoped, tag = 'output window, operand 0']
    #allocation6 [shape = 's32[2]{0}', space=sflag, size = 0x8, scoped, tag = 'scoped memory for tpu_custom_call.1']
    #allocation7 [shape = 'u8[8192]{0}', space=vmem, size = 0x2000, scoped, tag = 'output window, operand 1']
    #allocation8 [shape = 's32[2]{0}', space=sflag, size = 0x8, scoped, tag = 'scoped memory for tpu_custom_call.1']
    #allocation9 [shape = 'u8[8192]{0}', space=vmem, size = 0x2000, scoped, tag = 'output window, operand 2']
    %10 = vsyncpa [#allocation6], 0
    %s11 = scalar_lea.sflag [#allocation6], 1
    %12 = vsyncpa %s11, 0
    %13 = vsyncpa [#allocation8], 0
    %s14 = scalar_lea.sflag [#allocation8], 1
    %15 = vsyncpa %s14, 0
    loop: start=0, step=1, limit=4
    $region2: #{tpu_custom_call.1} parent=1 // loop_pre_header
      _
    $region3: #{tpu_custom_call.1} parent=1 // loop_header
      %s17 = sphi 0, %s21
      %p18 = scmp.ge.s32.totalorder %s17, 4
      %s24 = sphi 0, %s36
      %s25 = sphi 0, %s32
      %s26 = sphi 0, %s24
      %s27 = sphi 0, %s25
      %s28 = sphi 0, %s26
      %s29 = sphi 0, %s27
      %s41 = sphi 0, %s43
      %s44 = sphi 0, %s41
      %s45 = sphi 0, %s44
      %s61 = sphi 0, %s45
      %s69 = sphi 0, %s71
      %s72 = sphi 0, %s69
      %s73 = sphi 0, %s72
      %s89 = sphi 0, %s73
      %s95 = sphi 0, %s97
      %s98 = sphi 0, %s95
      %s99 = sphi 0, %s98
      %s115 = sphi 0, %s99
      %s121 = sphi 0, %s123
      %s124 = sphi 0, %s121
      %s125 = sphi 0, %s124
      %s141 = sphi 0, %s125
      %s147 = sphi 0, %s149
      %s150 = sphi 0, %s147
      %s151 = sphi 0, %s150
      %s167 = sphi 0, %s151
    $region4: #{tpu_custom_call.1} parent=1 // loop_header_branch
      %20 = sbr.rel (%p18) target = $region8
    $region5: #{tpu_custom_call.1} parent=1 // loop_body
      %s22 = ssub.s32 %s17, 1
      %s23 = ssub.s32 %s17, 2
      %s30 = sadd.s32 1, %s25
      %p31 = scmp.ge.s32.totalorder %s30, 1
      %s32 = scalar_select %p31, 0, %s30
      %s33 = sadd.s32 1, %s24
      %s34 = scalar_select %p31, %s33, %s24
      %p35 = scmp.ge.s32.totalorder %s34, 2
      %s36 = scalar_select %p35, 0, %s34
      %s37 = sadd.s32 %s24, %s25
      %s38 = sadd.s32 %s36, %s32
      %s39 = ssub.s32 %s37, %s38
      %p40 = scmp.eq.s32.totalorder %s39, 0
      %s42 = sadd.s32 %s41, 1
      %s43 = scalar_select %p40, %s41, %s42
      %p46 = pneg %p40
      %p47 = scmp.eq.s32.totalorder %s17, 1
      %p48 = por %p46, %p47
      %p49 = scmp.ne.s32.totalorder %s41, %s44
      %p50 = scmp.eq.s32.totalorder %s17, 0
      %p51 = por %p49, %p50
      %p52 = scmp.ne.s32.totalorder %s41, %s44
      %p53 = scmp.eq.s32.totalorder %s22, 1
      %p54 = por %p52, %p53
      %p55 = scmp.ne.s32.totalorder %s44, %s45
      %p56 = scmp.eq.s32.totalorder %s22, 0
      %p57 = por %p55, %p56
      %p58 = scmp.ne.s32.totalorder %s44, %s45
      %p59 = scmp.eq.s32.totalorder %s23, 1
      %p60 = por %p58, %p59
      %p62 = scmp.ne.s32.totalorder %s45, %s61
      %p63 = scmp.eq.s32.totalorder %s23, 0
      %p64 = por %p62, %p63
      %s65 = sadd.s32 %s24, %s25
      %s66 = sadd.s32 %s36, %s32
      %s67 = ssub.s32 %s65, %s66
      %p68 = scmp.eq.s32.totalorder %s67, 0
      %s70 = sadd.s32 %s69, 1
      %s71 = scalar_select %p68, %s69, %s70
      %p74 = pneg %p68
      %p75 = scmp.eq.s32.totalorder %s17, 1
      %p76 = por %p74, %p75
      %p77 = scmp.ne.s32.totalorder %s69, %s72
      %p78 = scmp.eq.s32.totalorder %s17, 0
      %p79 = por %p77, %p78
      %p80 = scmp.ne.s32.totalorder %s69, %s72
      %p81 = scmp.eq.s32.totalorder %s22, 1
      %p82 = por %p80, %p81
      %p83 = scmp.ne.s32.totalorder %s72, %s73
      %p84 = scmp.eq.s32.totalorder %s22, 0
      %p85 = por %p83, %p84
      %p86 = scmp.ne.s32.totalorder %s72, %s73
      %p87 = scmp.eq.s32.totalorder %s23, 1
      %p88 = por %p86, %p87
      %p90 = scmp.ne.s32.totalorder %s73, %s89
      %p91 = scmp.eq.s32.totalorder %s23, 0
      %p92 = por %p90, %p91
      %s93 = ssub.s32 %s24, %s36
      %p94 = scmp.eq.s32.totalorder %s93, 0
      %s96 = sadd.s32 %s95, 1
      %s97 = scalar_select %p94, %s95, %s96
      %p100 = pneg %p94
      %p101 = scmp.eq.s32.totalorder %s17, 1
      %p102 = por %p100, %p101
      %p103 = scmp.ne.s32.totalorder %s95, %s98
      %p104 = scmp.eq.s32.totalorder %s17, 0
      %p105 = por %p103, %p104
      %p106 = scmp.ne.s32.totalorder %s95, %s98
      %p107 = scmp.eq.s32.totalorder %s22, 1
      %p108 = por %p106, %p107
      %p109 = scmp.ne.s32.totalorder %s98, %s99
      %p110 = scmp.eq.s32.totalorder %s22, 0
      %p111 = por %p109, %p110
      %p112 = scmp.ne.s32.totalorder %s98, %s99
      %p113 = scmp.eq.s32.totalorder %s23, 1
      %p114 = por %p112, %p113
      %p116 = scmp.ne.s32.totalorder %s99, %s115
      %p117 = scmp.eq.s32.totalorder %s23, 0
      %p118 = por %p116, %p117
      %s119 = ssub.s32 %s24, %s36
      %p120 = scmp.eq.s32.totalorder %s119, 0
      %s122 = sadd.s32 %s121, 1
      %s123 = scalar_select %p120, %s121, %s122
      %p126 = pneg %p120
      %p127 = scmp.eq.s32.totalorder %s17, 1
      %p128 = por %p126, %p127
      %p129 = scmp.ne.s32.totalorder %s121, %s124
      %p130 = scmp.eq.s32.totalorder %s17, 0
      %p131 = por %p129, %p130
      %p132 = scmp.ne.s32.totalorder %s121, %s124
      %p133 = scmp.eq.s32.totalorder %s22, 1
      %p134 = por %p132, %p133
      %p135 = scmp.ne.s32.totalorder %s124, %s125
      %p136 = scmp.eq.s32.totalorder %s22, 0
      %p137 = por %p135, %p136
      %p138 = scmp.ne.s32.totalorder %s124, %s125
      %p139 = scmp.eq.s32.totalorder %s23, 1
      %p140 = por %p138, %p139
      %p142 = scmp.ne.s32.totalorder %s125, %s141
      %p143 = scmp.eq.s32.totalorder %s23, 0
      %p144 = por %p142, %p143
      %s145 = ssub.s32 %s24, %s36
      %p146 = scmp.eq.s32.totalorder %s145, 0
      %s148 = sadd.s32 %s147, 1
      %s149 = scalar_select %p146, %s147, %s148
      %p152 = pneg %p146
      %p153 = scmp.eq.s32.totalorder %s17, 1
      %p154 = por %p152, %p153
      %p155 = scmp.ne.s32.totalorder %s147, %s150
      %p156 = scmp.eq.s32.totalorder %s17, 0
      %p157 = por %p155, %p156
      %p158 = scmp.ne.s32.totalorder %s147, %s150
      %p159 = scmp.eq.s32.totalorder %s22, 1
      %p160 = por %p158, %p159
      %p161 = scmp.ne.s32.totalorder %s150, %s151
      %p162 = scmp.eq.s32.totalorder %s22, 0
      %p163 = por %p161, %p162
      %p164 = scmp.ne.s32.totalorder %s150, %s151
      %p165 = scmp.eq.s32.totalorder %s23, 1
      %p166 = por %p164, %p165
      %p168 = scmp.ne.s32.totalorder %s151, %s167
      %p169 = scmp.eq.s32.totalorder %s23, 0
      %p170 = por %p168, %p169
      %p171 = scmp.le.s32.totalorder 1, %s17
      %p172 = scmp.lt.s32.totalorder %s17, 3
      %p173 = pnand %p171, %p172
      %p174 = pneg %p173
      // Predicated region
      $region9: #{tpu_custom_call.1} parent=5 // pred_check
        _
      $region10: #{tpu_custom_call.1} parent=5 // pred_check_branch
        %176 = sbr.rel (%p173) target = $region12
      $region11: #{tpu_custom_call.1} parent=5 // pred_region
        %s177 = ssub.s32 %s17, 1
      $region12: #{tpu_custom_call.1} parent=5 // pred_fallthru
        _
      %p178 = scmp.lt.s32.totalorder %s17, 2
      // Predicated region
      $region13: #{tpu_custom_call.1} parent=5 // pred_check
        %p179 = pneg %p178
      $region14: #{tpu_custom_call.1} parent=5 // pred_check_branch
        %181 = sbr.rel (%p179) target = $region16
      $region15: #{tpu_custom_call.1} parent=5 // pred_region
        // Predicated region
        $region17: #{tpu_custom_call.1} parent=15 // pred_check
          %p182 = pneg %p51
        $region18: #{tpu_custom_call.1} parent=15 // pred_check_branch
          %184 = sbr.rel (%p182) target = $region20
        $region19: #{tpu_custom_call.1} parent=15 // pred_region
          %s185 = sadd.s32 %s24, %s25
          %s186 = smul.u32 2, %s185
          %p187 = scmp.lt.s32.totalorder %s186, 3
          %s188 = scalar_select %p187, %s186, 3
          %s189 = smul.addr %s188, 8
          %s190 = scalar_lea.vmem %s0, %s189
          %s191 = sadd.s32 %s24, %s25
          %s192 = smul.u32 2, %s191
        $region20: #{tpu_custom_call.1} parent=15 // pred_fallthru
          _
        // Predicated region
        $region21: #{tpu_custom_call.1} parent=15 // pred_check
          %p193 = pneg %p79
        $region22: #{tpu_custom_call.1} parent=15 // pred_check_branch
          %195 = sbr.rel (%p193) target = $region24
        $region23: #{tpu_custom_call.1} parent=15 // pred_region
          %s196 = sadd.s32 %s24, %s25
          %s197 = smul.u32 2, %s196
          %p198 = scmp.lt.s32.totalorder %s197, 3
          %s199 = scalar_select %p198, %s197, 3
          %s200 = smul.addr %s199, 8
          %s201 = scalar_lea.vmem %s1, %s200
          %s202 = sadd.s32 %s24, %s25
          %s203 = smul.u32 2, %s202
        $region24: #{tpu_custom_call.1} parent=15 // pred_fallthru
          _
      $region16: #{tpu_custom_call.1} parent=5 // pred_fallthru
        _
      %p204 = scmp.le.s32.totalorder 1, %s17
      %p205 = scmp.lt.s32.totalorder %s17, 3
      %p206 = pnand %p204, %p205
      %p207 = pneg %p206
      // Predicated region
      $region25: #{tpu_custom_call.1} parent=5 // pred_check
        _
      $region26: #{tpu_custom_call.1} parent=5 // pred_check_branch
        %209 = sbr.rel (%p206) target = $region28
      $region27: #{tpu_custom_call.1} parent=5 // pred_region
        %s210 = ssub.s32 %s17, 1
        %s211 = sadd.s32 %s26, %s27
        %s212 = smul.u32 2, %s211
        %p213 = scmp.lt.s32.totalorder %s212, 3
        %s214 = scalar_select %p213, %s212, 3
        %s215 = smul.addr %s214, 8
        %s216 = scalar_lea.vmem %s0, %s215
        %p217 = pneg %p57
        %p218 = pneg %p54
        %s219 = sadd.s32 %s26, %s27
        %s220 = smul.u32 2, %s219
        %p221 = scmp.lt.s32.totalorder %s220, 3
        %s222 = scalar_select %p221, %s220, 3
        %s223 = smul.addr %s222, 8
        %s224 = scalar_lea.vmem %s1, %s223
        %p225 = pneg %p85
        %p226 = pneg %p82
        %p227 = pneg %p111
        %p228 = pneg %p108
        %s229 = sand.u32 %s98, 1
        %s230 = scalar_lea.sflag [#allocation6], %s229
        %s231 = sand.u32 %s98, 1
        %s232 = smul.addr %s231, 8
        %s233 = scalar_lea.vmem [#allocation5], %s232
        %p234 = pneg %p137
        %p235 = pneg %p134
        %s236 = sand.u32 %s22, 1
        %s237 = scalar_lea.sflag [#allocation8], %s236
        %s238 = sand.u32 %s124, 1
        %s239 = smul.addr %s238, 8
        %s240 = scalar_lea.vmem [#allocation7], %s239
        %p241 = pneg %p163
        %p242 = pneg %p160
        %s243 = sand.u32 %s22, 1
        %s244 = scalar_lea.sflag [#allocation8], %s243
        %s245 = sand.u32 %s150, 1
        %s246 = smul.addr %s245, 8
        %s247 = scalar_lea.vmem [#allocation9], %s246
        %s248 = sadd.s32 %s26, %s27
        %s249 = smul.u32 2, %s248
        %p250 = scmp.lt.s32.totalorder %s249, 3
        %s251 = scalar_select %p250, %s249, 3
        %s252 = smul.addr %s251, 8
        %s253 = scalar_lea.vmem %s0, %s252
        %s254 = sadd.s32 %s26, %s27
        %s255 = smul.u32 2, %s254
        %s256 = sadd.s32 %s26, %s27
        %s257 = smul.u32 2, %s256
        %p258 = scmp.lt.s32.totalorder %s257, 3
        %s259 = scalar_select %p258, %s257, 3
        %s260 = smul.addr %s259, 8
        %s261 = scalar_lea.vmem %s1, %s260
        %s262 = sadd.s32 %s26, %s27
        %s263 = smul.u32 2, %s262
        %p264 = scmp.eq.s32.totalorder %s27, 0
        // Predicated region
        $region29: #{tpu_custom_call.1} parent=27 // pred_check
          %p265 = pneg %p264
        $region30: #{tpu_custom_call.1} parent=27 // pred_check_branch
          %267 = sbr.rel (%p265) target = $region32
        $region31: #{tpu_custom_call.1} parent=27 // pred_region
          %vm268 = vcmask 7168
          %269 = vst.msk [vmem:[#allocation2] sm:$0xff] %vm268, 0.0
          %270 = vst.msk [vmem:[#allocation2 + $0x8] sm:$0xff] %vm268, 0.0
          %271 = vst.msk [vmem:[#allocation3] sm:$0xff] %vm268, 0.0
          %272 = vst.msk [vmem:[#allocation3 + $0x8] sm:$0xff] %vm268, 0.0
          %273 = vst.msk [vmem:[#allocation4] sm:$0xff] %vm268, 0.0
          %274 = vst.msk [vmem:[#allocation4 + $0x8] sm:$0xff] %vm268, 0.0
        $region32: #{tpu_custom_call.1} parent=27 // pred_fallthru
          _
        %v275 = vld [vmem:[%s261] sm:$0xff]
        %v276 = vld [vmem:[%s261 + $0x8] sm:$0xff]
        %v277 = vld [vmem:[%s253] sm:$0xff]
        %v278 = vld [vmem:[%s253 + $0x8] sm:$0xff]
        %s279 = sadd.s32 %s26, %s27
        %s280 = smul.u32 %s279, 16
        %v281 = vlaneseq
        %v282 = vshrl.u32 %v281, 7
        %v283 = vadd.s32 %v282, 8
        %v284 = vstv %s280
        %v285 = vadd.s32 %v282, %v284
        %v286 = vadd.s32 %v283, %v284
        %vm287 = vcmp.lt.s32.totalorder %v285, 8
        %vm288 = vcmp.lt.s32.totalorder %v286, 8
        %v289 = vsel %vm287, 1, 0
        %v290 = vsel %vm288, 1, 0
        %v291 = vcvt.s32.f32 %v289
        %v292 = vcvt.s32.f32 %v290
        %vm293 = vcmask 261120
        %v294 = vsel %vm293, %v275, -inf
        %295 = vmax.xlane.f32.xlu0 %v294
        %v296 = vpop.xlane.xlu0 %295
        %v297 = vsel %vm293, %v276, -inf
        %298 = vmax.xlane.f32.xlu0 %v297
        %v299 = vpop.xlane.xlu0 %298
        %v300 = vsub.f32 %v275, %v296
        %v301 = vsub.f32 %v276, %v299
        %v302 = vmul.f32 %v300, 1.442695
        %v303 = vpow.pop %v302
        %v304 = vmul.f32 %v301, 1.442695
        %v305 = vpow.pop %v304
        %v306 = vsel %vm293, %v303, 0.0
        %307 = vadd.xlane.f32.xlu0 %v306
        %v308 = vpop.xlane.xlu0 %307
        %v309 = vsel %vm293, %v305, 0.0
        %310 = vadd.xlane.f32.xlu0 %v309
        %v311 = vpop.xlane.xlu0 %310
        %v312 = vlog2.pop %v308
        %v313 = vmul.f32 %v312, 0.6931472
        %v314 = vlog2.pop %v311
        %v315 = vmul.f32 %v314, 0.6931472
        %v316 = vlaneseq
        %v317 = vand.u32 %v316, 127
        %318 = vset.pattern.permute.xlu0 0
        %319 = vperm.xlu0 %318, %v277
        %v320 = vpop.permute.xlu0 %319
        %321 = vset.pattern.permute.xlu0 0
        %322 = vperm.xlu0 %321, %v278
        %v323 = vpop.permute.xlu0 %322
        %vm324 = vcmp.eq.s32.totalorder %v317, %v320
        %vm325 = vcmp.eq.s32.totalorder %v317, %v323
        %v326 = vsel %vm324, 1, 0
        %v327 = vsel %vm325, 1, 0
        %v328 = vcvt.s32.f32 %v326
        %v329 = vcvt.s32.f32 %v327
        %v330 = vsel %vm324, %v300, 0.0
        %v331 = vsel %vm325, %v301, 0.0
        %v332 = vsel %vm293, %v330, 0.0
        %333 = vadd.xlane.f32.xlu0 %v332
        %v334 = vpop.xlane.xlu0 %333
        %v335 = vsel %vm293, %v331, 0.0
        %336 = vadd.xlane.f32.xlu0 %v335
        %v337 = vpop.xlane.xlu0 %336
        %v338 = vsub.f32 %v313, %v334
        %v339 = vsub.f32 %v315, %v337
        %v340 = vmul.f32 %v338, %v291
        %v341 = vmul.f32 %v339, %v292
        %v342 = vrcp.pop %v308
        %v343 = vrcp.pop %v311
        %v344 = vmul.f32 %v303, %v342
        %v345 = vmul.f32 %v305, %v343
        %v346 = vsub.f32 %v344, %v328
        %v347 = vsub.f32 %v345, %v329
        %v348 = vmul.f32 %v346, %v346
        %v349 = vmul.f32 %v347, %v347
        %v350 = vsel %vm293, %v348, 0.0
        %351 = vadd.xlane.f32.xlu0 %v350
        %v352 = vpop.xlane.xlu0 %351
        %v353 = vsel %vm293, %v349, 0.0
        %354 = vadd.xlane.f32.xlu0 %v353
        %v355 = vpop.xlane.xlu0 %354
        %v356 = vmul.f32 %v352, %v291
        %v357 = vmul.f32 %v355, %v292
        %v358 = vmax.f32 %v344, 1e-07
        %v359 = vmax.f32 %v345, 1e-07
        %v360 = vsel %vm324, 0.0, %v358
        %v361 = vsel %vm325, 0.0, %v359
        %v362 = vsel %vm293, %v360, 0.0
        %363 = vadd.xlane.f32.xlu0 %v362
        %v364 = vpop.xlane.xlu0 %363
        %v365 = vsel %vm293, %v361, 0.0
        %366 = vadd.xlane.f32.xlu0 %v365
        %v367 = vpop.xlane.xlu0 %366
        %v368 = vmul.f32 %v364, 9.2103405
        %v369 = vmul.f32 %v367, 9.2103405
        %v370 = vmul.f32 %v368, %v291
        %v371 = vmul.f32 %v369, %v292
        %v372 = vld [vmem:[#allocation2] sm:$0xff]
        %v373 = vld [vmem:[#allocation2 + $0x8] sm:$0xff]
        %v374 = vadd.f32 %v372, %v340
        %v375 = vadd.f32 %v373, %v341
        %vm376 = vcmask 7168
        %377 = vst.msk [vmem:[#allocation2] sm:$0xff] %vm376, %v374
        %378 = vst.msk [vmem:[#allocation2 + $0x8] sm:$0xff] %vm376, %v375
        %v379 = vld [vmem:[#allocation3] sm:$0xff]
        %v380 = vld [vmem:[#allocation3 + $0x8] sm:$0xff]
        %v381 = vadd.f32 %v379, %v370
        %v382 = vadd.f32 %v380, %v371
        %383 = vst.msk [vmem:[#allocation3] sm:$0xff] %vm376, %v381
        %384 = vst.msk [vmem:[#allocation3 + $0x8] sm:$0xff] %vm376, %v382
        %v385 = vld [vmem:[#allocation4] sm:$0xff]
        %v386 = vld [vmem:[#allocation4 + $0x8] sm:$0xff]
        %v387 = vadd.f32 %v385, %v356
        %v388 = vadd.f32 %v386, %v357
        %389 = vst.msk [vmem:[#allocation4] sm:$0xff] %vm376, %v387
        %390 = vst.msk [vmem:[#allocation4 + $0x8] sm:$0xff] %vm376, %v388
        // Predicated region
        $region33: #{tpu_custom_call.1} parent=27 // pred_check
          %p391 = pneg %p264
        $region34: #{tpu_custom_call.1} parent=27 // pred_check_branch
          %393 = sbr.rel (%p391) target = $region36
        $region35: #{tpu_custom_call.1} parent=27 // pred_region
          %v394 = vld [vmem:[#allocation2] sm:$0xff]
          %v395 = vld [vmem:[#allocation2 + $0x8] sm:$0xff]
          %v396 = vsel %vm376, %v394, 0.0
          %v397 = vsel %vm376, %v395, 0.0
          %v398 = vadd.f32 %v396, %v397
          %399 = vadd.xlane.f32.xlu0 %v398
          %v400 = vpop.xlane.xlu0 %399
          %v401 = vrot.slane %v400, 4
          %v402 = vadd.f32 %v400, %v401
          %v403 = vrot.slane %v402, 2
          %v404 = vadd.f32 %v402, %v403
          %v405 = vrot.slane %v404, 1
          %v406 = vadd.f32 %v404, %v405
          %s407 = vtos %v406
          %v408 = vstv %s407
          %409 = vst [vmem:[%s233] sm:$0xff] %v408
          %v410 = vld [vmem:[#allocation3] sm:$0xff]
          %v411 = vld [vmem:[#allocation3 + $0x8] sm:$0xff]
          %v412 = vsel %vm376, %v410, 0.0
          %v413 = vsel %vm376, %v411, 0.0
          %v414 = vadd.f32 %v412, %v413
          %415 = vadd.xlane.f32.xlu0 %v414
          %v416 = vpop.xlane.xlu0 %415
          %v417 = vrot.slane %v416, 4
          %v418 = vadd.f32 %v416, %v417
          %v419 = vrot.slane %v418, 2
          %v420 = vadd.f32 %v418, %v419
          %v421 = vrot.slane %v420, 1
          %v422 = vadd.f32 %v420, %v421
          %s423 = vtos %v422
          %v424 = vstv %s423
          %425 = vst [vmem:[%s240] sm:$0xff] %v424
          %v426 = vld [vmem:[#allocation4] sm:$0xff]
          %v427 = vld [vmem:[#allocation4 + $0x8] sm:$0xff]
          %v428 = vsel %vm376, %v426, 0.0
          %v429 = vsel %vm376, %v427, 0.0
          %v430 = vadd.f32 %v428, %v429
          %431 = vadd.xlane.f32.xlu0 %v430
          %v432 = vpop.xlane.xlu0 %431
          %v433 = vrot.slane %v432, 4
          %v434 = vadd.f32 %v432, %v433
          %v435 = vrot.slane %v434, 2
          %v436 = vadd.f32 %v434, %v435
          %v437 = vrot.slane %v436, 1
          %v438 = vadd.f32 %v436, %v437
          %s439 = vtos %v438
          %v440 = vstv %s439
          %441 = vst [vmem:[%s247] sm:$0xff] %v440
        $region36: #{tpu_custom_call.1} parent=27 // pred_fallthru
          _
        %s442 = sand.u32 %s98, 1
        %s443 = scalar_lea.sflag [#allocation6], %s442
        %s444 = sand.u32 %s98, 1
        %s445 = smul.addr %s444, 8
        %s446 = scalar_lea.vmem [#allocation5], %s445
        %s447 = sand.u32 %s22, 1
        %s448 = scalar_lea.sflag [#allocation8], %s447
        %s449 = sand.u32 %s124, 1
        %s450 = smul.addr %s449, 8
        %s451 = scalar_lea.vmem [#allocation7], %s450
        %s452 = sand.u32 %s22, 1
        %s453 = scalar_lea.sflag [#allocation8], %s452
        %s454 = sand.u32 %s150, 1
        %s455 = smul.addr %s454, 8
        %s456 = scalar_lea.vmem [#allocation9], %s455
        // Predicated region
        $region37: #{tpu_custom_call.1} parent=27 // pred_check
          %p457 = pneg %p108
        $region38: #{tpu_custom_call.1} parent=27 // pred_check_branch
          %459 = sbr.rel (%p457) target = $region40
        $region39: #{tpu_custom_call.1} parent=27 // pred_region
          %s461 = ssub.s32 128, 128
          %462 = vsyncadd %s443, %s461
          %s463 = smul.addr %s26, 128
          %s464 = scalar_lea.hbm %s2, %s463
          %s466 = sshll.u32 %s446, 4
          %s467 = int_to_ptr.vmem [resolvable:$true] %s466
          %469 = dma.vmem_to_hbm [thread:$0]  %s467, 128, %s464, %s443
        $region40: #{tpu_custom_call.1} parent=27 // pred_fallthru
          _
        // Predicated region
        $region41: #{tpu_custom_call.1} parent=27 // pred_check
          %p470 = pneg %p134
        $region42: #{tpu_custom_call.1} parent=27 // pred_check_branch
          %472 = sbr.rel (%p470) target = $region44
        $region43: #{tpu_custom_call.1} parent=27 // pred_region
          %s474 = ssub.s32 128, 128
          %475 = vsyncadd %s448, %s474
          %s476 = smul.addr %s26, 128
          %s477 = scalar_lea.hbm %s3, %s476
          %s479 = sshll.u32 %s451, 4
          %s480 = int_to_ptr.vmem [resolvable:$true] %s479
          %482 = dma.vmem_to_hbm [thread:$0]  %s480, 128, %s477, %s448
        $region44: #{tpu_custom_call.1} parent=27 // pred_fallthru
          _
        // Predicated region
        $region45: #{tpu_custom_call.1} parent=27 // pred_check
          %p483 = pneg %p160
        $region46: #{tpu_custom_call.1} parent=27 // pred_check_branch
          %485 = sbr.rel (%p483) target = $region48
        $region47: #{tpu_custom_call.1} parent=27 // pred_region
          %s487 = ssub.s32 128, 128
          %488 = vsyncadd %s453, %s487
          %s489 = smul.addr %s26, 128
          %s490 = scalar_lea.hbm %s4, %s489
          %s492 = sshll.u32 %s456, 4
          %s493 = int_to_ptr.vmem [resolvable:$true] %s492
          %495 = dma.vmem_to_hbm [thread:$0]  %s493, 128, %s490, %s453
        $region48: #{tpu_custom_call.1} parent=27 // pred_fallthru
          _
      $region28: #{tpu_custom_call.1} parent=5 // pred_fallthru
        _
      %p496 = scmp.le.s32.totalorder 2, %s17
      // Predicated region
      $region49: #{tpu_custom_call.1} parent=5 // pred_check
        %p497 = pneg %p496
      $region50: #{tpu_custom_call.1} parent=5 // pred_check_branch
        %499 = sbr.rel (%p497) target = $region52
      $region51: #{tpu_custom_call.1} parent=5 // pred_region
        %s500 = ssub.s32 %s17, 2
        // Predicated region
        $region53: #{tpu_custom_call.1} parent=51 // pred_check
          %p501 = pneg %p114
        $region54: #{tpu_custom_call.1} parent=51 // pred_check_branch
          %503 = sbr.rel (%p501) target = $region56
        $region55: #{tpu_custom_call.1} parent=51 // pred_region
          %s504 = sand.u32 %s99, 1
          %s505 = scalar_lea.sflag [#allocation6], %s504
          %s506 = sand.u32 %s99, 1
          %s507 = smul.addr %s506, 8
          %s508 = scalar_lea.vmem [#allocation5], %s507
          %509 = dma.done %s505, 128
        $region56: #{tpu_custom_call.1} parent=51 // pred_fallthru
          _
        // Predicated region
        $region57: #{tpu_custom_call.1} parent=51 // pred_check
          %p510 = pneg %p140
        $region58: #{tpu_custom_call.1} parent=51 // pred_check_branch
          %512 = sbr.rel (%p510) target = $region60
        $region59: #{tpu_custom_call.1} parent=51 // pred_region
          %s513 = sand.u32 %s23, 1
          %s514 = scalar_lea.sflag [#allocation8], %s513
          %s515 = sand.u32 %s125, 1
          %s516 = smul.addr %s515, 8
          %s517 = scalar_lea.vmem [#allocation7], %s516
          %518 = dma.done %s514, 128
        $region60: #{tpu_custom_call.1} parent=51 // pred_fallthru
          _
        // Predicated region
        $region61: #{tpu_custom_call.1} parent=51 // pred_check
          %p519 = pneg %p166
        $region62: #{tpu_custom_call.1} parent=51 // pred_check_branch
          %521 = sbr.rel (%p519) target = $region64
        $region63: #{tpu_custom_call.1} parent=51 // pred_region
          %s522 = sand.u32 %s23, 1
          %s523 = scalar_lea.sflag [#allocation8], %s522
          %s524 = sand.u32 %s151, 1
          %s525 = smul.addr %s524, 8
          %s526 = scalar_lea.vmem [#allocation9], %s525
          %527 = dma.done %s523, 128
        $region64: #{tpu_custom_call.1} parent=51 // pred_fallthru
          _
      $region52: #{tpu_custom_call.1} parent=5 // pred_fallthru
        _
    $region6: #{tpu_custom_call.1} parent=1 // loop_footer
      %s21 = sadd.s32 1, %s17
    $region7: #{tpu_custom_call.1} parent=1 // loop_footer_branch
      %16 = sbr.rel target = $region3
    $region8: #{tpu_custom_call.1} parent=1 // loop_exit
      _
    %528 = vsyncpa [#allocation6], 1
    %s529 = scalar_lea.sflag [#allocation6], 1
    %530 = vsyncpa %s529, 1
    %531 = vsyncpa [#allocation8], 1
    %s532 = scalar_lea.sflag [#allocation8], 1
    %533 = vsyncpa %s532, 1

</llo_original>
